<compile_context>
chip_gen: v5e
topology: v5e:2x2
jax: 0.10.0
libtpu: 0.0.40
codegen_flags: <defaults>
</compile_context>

<pallas_src>
import jax
import jax.numpy as jnp
from jax.experimental import pallas as pl
from jax.experimental.pallas import tpu as pltpu

HIDDEN = 128


def _critic_kernel(s_ref, a_ref, w1s_ref, w1a_ref, b1_ref, w2_ref, b2_ref,
                   w3_ref, b3_ref, o_ref):
    # Layer 1 — the torch.cat is fused away:
    #   cat([s, a]) @ W1  ==  s @ W1[:S] + a @ W1[S:]
    s = s_ref[...].astype(jnp.bfloat16)
    a = a_ref[...].astype(jnp.bfloat16)
    h1 = (jnp.dot(s, w1s_ref[...], preferred_element_type=jnp.float32)
          + jnp.dot(a, w1a_ref[...], preferred_element_type=jnp.float32)
          + b1_ref[...])
    h1 = jnp.maximum(h1, 0.0)

    # Layer 2 — bf16 operands, f32 accumulation on the MXU.
    h2 = jnp.dot(h1.astype(jnp.bfloat16), w2_ref[...],
                 preferred_element_type=jnp.float32) + b2_ref[...]
    h2 = jnp.maximum(h2, 0.0)

    # Layer 3 (128 -> 1): an N=1 matmul is an almost-empty MXU pass, so use a
    # VPU multiply + cross-lane reduce instead.  b3 is a scalar in SMEM.
    w3_row = w3_ref[...]                                   # (1, H) f32
    out = jnp.sum(h2 * w3_row, axis=-1, keepdims=True) + b3_ref[0, 0]
    o_ref[...] = out.astype(o_ref.dtype)


def critic_forward(state, action, params, *, batch_tile=256):
    """state: (B, S) f32, action: (B, A) f32 -> (B, 1) f32."""
    w1s, w1a, b1, w2, b2, w3, b3 = params
    B, S = state.shape
    A = action.shape[1]

    tb = min(B, batch_tile)
    grid = (pl.cdiv(B, tb),)

    def batch_spec(cols):
        # Batch-tiled activation input, streamed + double-buffered by Pallas.
        return pl.BlockSpec((tb, cols), lambda i: (i, 0), memory_space=pltpu.VMEM)

    def resident(arr):
        # Whole weight/bias array resident in VMEM; index_map ignores the grid.
        return pl.BlockSpec(arr.shape, lambda i: (0,) * arr.ndim,
                            memory_space=pltpu.VMEM)

    return pl.pallas_call(
        _critic_kernel,
        out_shape=jax.ShapeDtypeStruct((B, 1), jnp.float32),
        grid=grid,
        in_specs=[
            batch_spec(S),                          # state  (tb, S)
            batch_spec(A),                          # action (tb, A)
            resident(w1s),                          # (S, H)  bf16
            resident(w1a),                          # (A, H)  bf16
            resident(b1),                           # (1, H)  f32
            resident(w2),                           # (H, H)  bf16
            resident(b2),                           # (1, H)  f32
            resident(w3),                           # (1, H)  f32 (fc3 weight row)
            pl.BlockSpec(memory_space=pltpu.SMEM),  # b3 scalar (1, 1) f32
        ],
        out_specs=pl.BlockSpec((tb, 1), lambda i: (i, 0), memory_space=pltpu.VMEM),
        compiler_params=pltpu.CompilerParams(
            dimension_semantics=("parallel",)),
    )(state, action, w1s, w1a, b1, w2, b2, w3, b3)


def init_critic_params(key, state_dim, action_dim, hidden=HIDDEN):
    """PyTorch nn.Linear default init: U(-1/sqrt(fan_in), 1/sqrt(fan_in)).

    Kernel-friendly storage:
      fc1 weight split along its input axis (fuses torch.cat), MXU-side weights
      stored in bf16, fc3 weight stored as a (1, hidden) row, b3 as (1,1)."""
    ks = jax.random.split(key, 6)

    def lin(kw, kb, fan_in, fan_out):
        bound = 1.0 / jnp.sqrt(jnp.float32(fan_in))
        w = jax.random.uniform(kw, (fan_in, fan_out), jnp.float32, -bound, bound)
        b = jax.random.uniform(kb, (1, fan_out), jnp.float32, -bound, bound)
        return w, b

    in_dim = state_dim + action_dim
    w1, b1 = lin(ks[0], ks[1], in_dim, hidden)
    w2, b2 = lin(ks[2], ks[3], hidden, hidden)
    w3, b3 = lin(ks[4], ks[5], hidden, 1)

    return (w1[:state_dim].astype(jnp.bfloat16),   # w1_state  (S, H)
            w1[state_dim:].astype(jnp.bfloat16),   # w1_action (A, H)
            b1,                                    # (1, H) f32
            w2.astype(jnp.bfloat16),               # (H, H)
            b2,                                    # (1, H) f32
            w3.T,                                  # (1, H) f32 row for VPU layer 3
            b3.reshape(1, 1))                      # (1, 1) f32


def critic_reference(state, action, params):
    w1s, w1a, b1, w2, b2, w3_row, b3 = params
    w1 = jnp.concatenate([w1s.astype(jnp.float32), w1a.astype(jnp.float32)], axis=0)
    x = jnp.concatenate([state, action], axis=1).astype(jnp.float32)
    h1 = jnp.maximum(x @ w1 + b1, 0.0)
    h2 = jnp.maximum(h1 @ w2.astype(jnp.float32) + b2, 0.0)
    return h2 @ w3_row.T.astype(jnp.float32) + b3


if __name__ == "__main__":
    key = jax.random.PRNGKey(0)
    k_s, k_a, k_p, k_s2, k_a2 = jax.random.split(key, 5)

    state_dim, action_dim = 24, 8
    params = init_critic_params(k_p, state_dim, action_dim)

    # Small, latency-bound case (grid collapses to (1,)).
    batch = 8
    state = jax.random.normal(k_s, (batch, state_dim), jnp.float32)
    action = jax.random.normal(k_a, (batch, action_dim), jnp.float32)
    out = jax.block_until_ready(critic_forward(state, action, params))
    ref = critic_reference(state, action, params)
    assert out.shape == (batch, 1)
    assert jnp.allclose(out, ref, atol=2e-2, rtol=2e-2), \
        float(jnp.max(jnp.abs(out - ref)))

    # Replay-buffer sized case: batch tiled (2 parallel tiles -> both TCs on v7x).
    big_batch = 512
    state_b = jax.random.normal(k_s2, (big_batch, state_dim), jnp.float32)
    action_b = jax.random.normal(k_a2, (big_batch, action_dim), jnp.float32)
    out_b = jax.block_until_ready(critic_forward(state_b, action_b, params))
    ref_b = critic_reference(state_b, action_b, params)
    assert out_b.shape == (big_batch, 1)
    assert jnp.allclose(out_b, ref_b, atol=2e-2, rtol=2e-2), \
        float(jnp.max(jnp.abs(out_b - ref_b)))

    print("KERNEL_OK")
</pallas_src>

<mosaic_0001>
module attributes {stable_mosaic.version = 11 : i64} {
  func.func @_critic_kernel(%arg0: i32, %arg1: memref<8x24xf32, #tpu.memory_space<vmem>>, %arg2: memref<8x8xf32, #tpu.memory_space<vmem>>, %arg3: memref<24x128xbf16, #tpu.memory_space<vmem>>, %arg4: memref<8x128xbf16, #tpu.memory_space<vmem>>, %arg5: memref<1x128xf32, #tpu.memory_space<vmem>>, %arg6: memref<128x128xbf16, #tpu.memory_space<vmem>>, %arg7: memref<1x128xf32, #tpu.memory_space<vmem>>, %arg8: memref<1x128xf32, #tpu.memory_space<vmem>>, %arg9: memref<1x1xf32, #tpu.memory_space<smem>>, %arg10: memref<8x1xf32, #tpu.memory_space<vmem>>) attributes {dimension_semantics = [#tpu.dimension_semantics<parallel>], iteration_bounds = array<i64: 1>, scalar_prefetch = 0 : i64, scratch_operands = 0 : i64, tpu.core_type = #tpu.core_type<tc>, window_params = [{transform_indices = @transform_0, window_bounds = array<i64: 8, 24>}, {transform_indices = @transform_1, window_bounds = array<i64: 8, 8>}, {pipeline_mode = #tpu.pipeline_mode<synchronous>, transform_indices = @transform_2, window_bounds = array<i64: 24, 128>}, {pipeline_mode = #tpu.pipeline_mode<synchronous>, transform_indices = @transform_3, window_bounds = array<i64: 8, 128>}, {pipeline_mode = #tpu.pipeline_mode<synchronous>, transform_indices = @transform_4, window_bounds = array<i64: 1, 128>}, {pipeline_mode = #tpu.pipeline_mode<synchronous>, transform_indices = @transform_5, window_bounds = array<i64: 128, 128>}, {pipeline_mode = #tpu.pipeline_mode<synchronous>, transform_indices = @transform_6, window_bounds = array<i64: 1, 128>}, {pipeline_mode = #tpu.pipeline_mode<synchronous>, transform_indices = @transform_7, window_bounds = array<i64: 1, 128>}, {transform_indices = @transform_8, window_bounds = array<i64: 1, 1>}, {transform_indices = @transform_9, window_bounds = array<i64: 8, 1>}]} {
    %c0 = arith.constant 0 : index
    %c0_0 = arith.constant 0 : index
    %0 = vector.load %arg1[%c0, %c0_0] : memref<8x24xf32, #tpu.memory_space<vmem>>, vector<8x24xf32>
    %1 = arith.truncf %0 : vector<8x24xf32> to vector<8x24xbf16>
    %c0_1 = arith.constant 0 : index
    %c0_2 = arith.constant 0 : index
    %2 = vector.load %arg2[%c0_1, %c0_2] : memref<8x8xf32, #tpu.memory_space<vmem>>, vector<8x8xf32>
    %3 = arith.truncf %2 : vector<8x8xf32> to vector<8x8xbf16>
    %c0_3 = arith.constant 0 : index
    %c0_4 = arith.constant 0 : index
    %4 = vector.load %arg3[%c0_3, %c0_4] : memref<24x128xbf16, #tpu.memory_space<vmem>>, vector<24x128xbf16>
    %cst = arith.constant dense<0.000000e+00> : vector<8x128xf32>
    %5 = tpu.matmul %1, %4, %cst {dimension_numbers = #tpu.dot_dimension_numbers<[1], [0], [0], [1], [0, 0, 1, 1], [], []>} : vector<8x24xbf16>, vector<24x128xbf16>, vector<8x128xf32> -> vector<8x128xf32>
    %c0_5 = arith.constant 0 : index
    %c0_6 = arith.constant 0 : index
    %6 = vector.load %arg4[%c0_5, %c0_6] : memref<8x128xbf16, #tpu.memory_space<vmem>>, vector<8x128xbf16>
    %cst_7 = arith.constant dense<0.000000e+00> : vector<8x128xf32>
    %7 = tpu.matmul %3, %6, %cst_7 {dimension_numbers = #tpu.dot_dimension_numbers<[1], [0], [0], [1], [0, 0, 1, 1], [], []>} : vector<8x8xbf16>, vector<8x128xbf16>, vector<8x128xf32> -> vector<8x128xf32>
    %8 = arith.addf %5, %7 : vector<8x128xf32>
    %c0_8 = arith.constant 0 : index
    %c0_9 = arith.constant 0 : index
    %9 = vector.load %arg5[%c0_8, %c0_9] : memref<1x128xf32, #tpu.memory_space<vmem>>, vector<1x128xf32>
    %10 = vector.broadcast %9 : vector<1x128xf32> to vector<8x128xf32>
    %11 = arith.addf %8, %10 : vector<8x128xf32>
    %cst_10 = arith.constant 0.000000e+00 : f32
    %12 = vector.broadcast %cst_10 : f32 to vector<8x128xf32>
    %13 = arith.maximumf %11, %12 : vector<8x128xf32>
    %14 = arith.truncf %13 : vector<8x128xf32> to vector<8x128xbf16>
    %c0_11 = arith.constant 0 : index
    %c0_12 = arith.constant 0 : index
    %15 = vector.load %arg6[%c0_11, %c0_12] : memref<128x128xbf16, #tpu.memory_space<vmem>>, vector<128x128xbf16>
    %cst_13 = arith.constant dense<0.000000e+00> : vector<8x128xf32>
    %16 = tpu.matmul %14, %15, %cst_13 {dimension_numbers = #tpu.dot_dimension_numbers<[1], [0], [0], [1], [0, 0, 1, 1], [], []>} : vector<8x128xbf16>, vector<128x128xbf16>, vector<8x128xf32> -> vector<8x128xf32>
    %c0_14 = arith.constant 0 : index
    %c0_15 = arith.constant 0 : index
    %17 = vector.load %arg7[%c0_14, %c0_15] : memref<1x128xf32, #tpu.memory_space<vmem>>, vector<1x128xf32>
    %18 = vector.broadcast %17 : vector<1x128xf32> to vector<8x128xf32>
    %19 = arith.addf %16, %18 : vector<8x128xf32>
    %cst_16 = arith.constant 0.000000e+00 : f32
    %20 = vector.broadcast %cst_16 : f32 to vector<8x128xf32>
    %21 = arith.maximumf %19, %20 : vector<8x128xf32>
    %c0_17 = arith.constant 0 : index
    %c0_18 = arith.constant 0 : index
    %22 = vector.load %arg8[%c0_17, %c0_18] : memref<1x128xf32, #tpu.memory_space<vmem>>, vector<1x128xf32>
    %23 = vector.broadcast %22 : vector<1x128xf32> to vector<8x128xf32>
    %24 = arith.mulf %21, %23 : vector<8x128xf32>
    %cst_19 = arith.constant dense<0.000000e+00> : vector<8xf32>
    %25 = vector.multi_reduction <add>, %24, %cst_19 [1] : vector<8x128xf32> to vector<8xf32>
    %26 = vector.shape_cast %25 : vector<8xf32> to vector<8x1xf32>
    %c0_20 = arith.constant 0 : index
    %c0_21 = arith.constant 0 : index
    %27 = memref.load %arg9[%c0_20, %c0_21] : memref<1x1xf32, #tpu.memory_space<smem>>
    %28 = vector.broadcast %27 : f32 to vector<8x1xf32>
    %29 = arith.addf %26, %28 : vector<8x1xf32>
    %c0_22 = arith.constant 0 : index
    %c0_23 = arith.constant 0 : index
    %30 = vector.load %arg10[%c0_22, %c0_23] : memref<8x1xf32, #tpu.memory_space<vmem>>, vector<8x1xf32>
    tpu.vector_store %arg10[%c0_22, %c0_23], %29 {strides = array<i32>} : memref<8x1xf32, #tpu.memory_space<vmem>>, vector<8x1xf32>,
    return
  }
  func.func @transform_0(%arg0: i32) -> (i32, i32) {
    %c0_i32 = arith.constant 0 : i32
    %c0_i32_0 = arith.constant 0 : i32
    return %arg0, %c0_i32 : i32, i32
  }
  func.func @transform_1(%arg0: i32) -> (i32, i32) {
    %c0_i32 = arith.constant 0 : i32
    %c0_i32_0 = arith.constant 0 : i32
    return %arg0, %c0_i32 : i32, i32
  }
  func.func @transform_2(%arg0: i32) -> (i32, i32) {
    %c0_i32 = arith.constant 0 : i32
    %c0_i32_0 = arith.constant 0 : i32
    %c0_i32_1 = arith.constant 0 : i32
    return %c0_i32, %c0_i32_0 : i32, i32
  }
  func.func @transform_3(%arg0: i32) -> (i32, i32) {
    %c0_i32 = arith.constant 0 : i32
    %c0_i32_0 = arith.constant 0 : i32
    %c0_i32_1 = arith.constant 0 : i32
    return %c0_i32, %c0_i32_0 : i32, i32
  }
  func.func @transform_4(%arg0: i32) -> (i32, i32) {
    %c0_i32 = arith.constant 0 : i32
    %c0_i32_0 = arith.constant 0 : i32
    %c0_i32_1 = arith.constant 0 : i32
    return %c0_i32, %c0_i32_0 : i32, i32
  }
  func.func @transform_5(%arg0: i32) -> (i32, i32) {
    %c0_i32 = arith.constant 0 : i32
    %c0_i32_0 = arith.constant 0 : i32
    %c0_i32_1 = arith.constant 0 : i32
    return %c0_i32, %c0_i32_0 : i32, i32
  }
  func.func @transform_6(%arg0: i32) -> (i32, i32) {
    %c0_i32 = arith.constant 0 : i32
    %c0_i32_0 = arith.constant 0 : i32
    %c0_i32_1 = arith.constant 0 : i32
    return %c0_i32, %c0_i32_0 : i32, i32
  }
  func.func @transform_7(%arg0: i32) -> (i32, i32) {
    %c0_i32 = arith.constant 0 : i32
    %c0_i32_0 = arith.constant 0 : i32
    %c0_i32_1 = arith.constant 0 : i32
    return %c0_i32, %c0_i32_0 : i32, i32
  }
  func.func @transform_8(%arg0: i32) -> (i32, i32) {
    %c0_i32 = arith.constant 0 : i32
    %c0_i32_0 = arith.constant 0 : i32
    %c0_i32_1 = arith.constant 0 : i32
    return %c0_i32, %c0_i32_0 : i32, i32
  }
  func.func @transform_9(%arg0: i32) -> (i32, i32) {
    %c0_i32 = arith.constant 0 : i32
    %c0_i32_0 = arith.constant 0 : i32
    return %arg0, %c0_i32 : i32, i32
  }
}

</mosaic_0001>

<llo_original>
// kernel: tpu_custom_call.1
$region0: #{tpu_custom_call.1}
  #allocation0 [shape = 'u32[]', space=smem, size = 0x4, offset = 0x4, fixed_abs, tag = 'smem constant byte address 0x4 - core index']
  #allocation1 [shape = 'u32[72,128]{1,0:T(1,128)}', space=vmem, size = 0x9000, scoped, tag = 'internal scratch']
  #allocation2 [shape = 'f32[1,1]{1,0:T(1,128)S(6)}', space=smem, size = 0x200, scoped, tag = 'scoped memory for tpu_custom_call.1']
  %s0 = inlined_call_operand.hbm [shape: f32[8,24], index: 0, kind: input, shape index: {}]
  %s1 = inlined_call_operand.hbm [shape: f32[8,8], index: 1, kind: input, shape index: {}]
  %s2 = inlined_call_operand.hbm [shape: bf16[24,128], index: 2, kind: input, shape index: {}]
  %s3 = inlined_call_operand.vmem [shape: bf16[8,128], index: 3, kind: input, shape index: {}]
  %s4 = inlined_call_operand.vmem [shape: f32[1,128], index: 4, kind: input, shape index: {}]
  %s5 = inlined_call_operand.hbm [shape: bf16[128,128], index: 5, kind: input, shape index: {}]
  %s6 = inlined_call_operand.vmem [shape: f32[1,128], index: 6, kind: input, shape index: {}]
  %s7 = inlined_call_operand.vmem [shape: f32[1,128], index: 7, kind: input, shape index: {}]
  %s8 = inlined_call_operand.<no memory space> [shape: f32[1,1], index: 8, kind: input, shape index: {}]
  %s9 = inlined_call_operand.vmem [shape: f32[8,1], index: 9, kind: output, shape index: {}]
  %s10 = sld [smem:[#allocation0]]
  $region62: #{tpu_custom_call.1} parent=0
    _
  %s12 = ssub.s32 1, %s10
  %s13 = scalar_select 0, %s12, %s10
  %14 = sst [smem:[#allocation2]] %s8
  $region1: #{tpu_custom_call.1} parent=0
    #allocation3 [shape = 'u8[4096]{0}', space=vmem, size = 0x1000, scoped, tag = 'input window, operand 0, single buffered']
    #allocation4 [shape = 's32[1]{0}', space=sflag, size = 0x4, scoped, tag = 'scoped memory for tpu_custom_call.1']
    #allocation5 [shape = 'u8[4096]{0}', space=vmem, size = 0x1000, scoped, tag = 'input window, operand 1, single buffered']
    #allocation6 [shape = 's32[1]{0}', space=sflag, size = 0x4, scoped, tag = 'scoped memory for tpu_custom_call.1']
    #allocation7 [shape = 'u8[6144]{0}', space=vmem, size = 0x1800, scoped, tag = 'input window, operand 2, single buffered']
    #allocation8 [shape = 'u8[32768]{0}', space=vmem, size = 0x8000, scoped, tag = 'input window, operand 5, single buffered']
    #allocation9 [shape = 's32[1]{0}', space=sflag, size = 0x4, scoped, tag = 'scoped memory for tpu_custom_call.1']
    %15 = vsyncpa [#allocation4], 0
    %16 = vsyncpa [#allocation6], 0
    %17 = vsyncpa [#allocation9], 0
    // Predicated region
    $region2: #{tpu_custom_call.1} parent=1 // pred_check
      _
    $region3: #{tpu_custom_call.1} parent=1 // pred_check_branch
      %19 = sbr.rel (0) target = $region5
    $region4: #{tpu_custom_call.1} parent=1 // pred_region
      %21 = vsyncadd [#allocation4], 0
      %s23 = sshll.u32 %s0, 4
      %s24 = int_to_ptr.hbm [resolvable:$true] %s23
      %s25 = sshll.u32 [#allocation3], 4
      %s26 = int_to_ptr.vmem [resolvable:$true] %s25
      %28 = dma.hbm_to_vmem [thread:$0]  %s24, 128, %s26, [#allocation4]
    $region5: #{tpu_custom_call.1} parent=1 // pred_fallthru
      _
    // Predicated region
    $region6: #{tpu_custom_call.1} parent=1 // pred_check
      _
    $region7: #{tpu_custom_call.1} parent=1 // pred_check_branch
      %30 = sbr.rel (0) target = $region9
    $region8: #{tpu_custom_call.1} parent=1 // pred_region
      %32 = vsyncadd [#allocation6], 0
      %s34 = sshll.u32 %s1, 4
      %s35 = int_to_ptr.hbm [resolvable:$true] %s34
      %s36 = sshll.u32 [#allocation5], 4
      %s37 = int_to_ptr.vmem [resolvable:$true] %s36
      %39 = dma.hbm_to_vmem [thread:$0]  %s35, 128, %s37, [#allocation6]
    $region9: #{tpu_custom_call.1} parent=1 // pred_fallthru
      _
    // Predicated region
    $region10: #{tpu_custom_call.1} parent=1 // pred_check
      _
    $region11: #{tpu_custom_call.1} parent=1 // pred_check_branch
      %41 = sbr.rel (0) target = $region13
    $region12: #{tpu_custom_call.1} parent=1 // pred_region
      %43 = vsyncadd [#allocation6], 0
      %s44 = sshll.u32 %s2, 4
      %s45 = int_to_ptr.hbm [resolvable:$true] %s44
      %s46 = sshll.u32 [#allocation7], 4
      %s47 = int_to_ptr.vmem [resolvable:$true] %s46
      %52 = dma.hbm_to_vmem [thread:$0]  %s45, 192, %s47, [#allocation6], 64, 64, 4
    $region13: #{tpu_custom_call.1} parent=1 // pred_fallthru
      _
    // Predicated region
    $region14: #{tpu_custom_call.1} parent=1 // pred_check
      _
    $region15: #{tpu_custom_call.1} parent=1 // pred_check_branch
      %54 = sbr.rel (0) target = $region17
    $region16: #{tpu_custom_call.1} parent=1 // pred_region
      _
    $region17: #{tpu_custom_call.1} parent=1 // pred_fallthru
      _
    // Predicated region
    $region18: #{tpu_custom_call.1} parent=1 // pred_check
      _
    $region19: #{tpu_custom_call.1} parent=1 // pred_check_branch
      %56 = sbr.rel (0) target = $region21
    $region20: #{tpu_custom_call.1} parent=1 // pred_region
      _
    $region21: #{tpu_custom_call.1} parent=1 // pred_fallthru
      _
    // Predicated region
    $region22: #{tpu_custom_call.1} parent=1 // pred_check
      _
    $region23: #{tpu_custom_call.1} parent=1 // pred_check_branch
      %58 = sbr.rel (0) target = $region25
    $region24: #{tpu_custom_call.1} parent=1 // pred_region
      %60 = vsyncadd [#allocation9], 0
      %s61 = sshll.u32 %s5, 4
      %s62 = int_to_ptr.hbm [resolvable:$true] %s61
      %s63 = sshll.u32 [#allocation8], 4
      %s64 = int_to_ptr.vmem [resolvable:$true] %s63
      %69 = dma.hbm_to_vmem [thread:$0]  %s62, 1024, %s64, [#allocation9], 64, 64, 4
    $region25: #{tpu_custom_call.1} parent=1 // pred_fallthru
      _
    // Predicated region
    $region26: #{tpu_custom_call.1} parent=1 // pred_check
      _
    $region27: #{tpu_custom_call.1} parent=1 // pred_check_branch
      %71 = sbr.rel (0) target = $region29
    $region28: #{tpu_custom_call.1} parent=1 // pred_region
      _
    $region29: #{tpu_custom_call.1} parent=1 // pred_fallthru
      _
    // Predicated region
    $region30: #{tpu_custom_call.1} parent=1 // pred_check
      _
    $region31: #{tpu_custom_call.1} parent=1 // pred_check_branch
      %73 = sbr.rel (0) target = $region33
    $region32: #{tpu_custom_call.1} parent=1 // pred_region
      _
    $region33: #{tpu_custom_call.1} parent=1 // pred_fallthru
      _
    // Predicated region
    $region34: #{tpu_custom_call.1} parent=1 // pred_check
      _
    $region35: #{tpu_custom_call.1} parent=1 // pred_check_branch
      %75 = sbr.rel (0) target = $region37
    $region36: #{tpu_custom_call.1} parent=1 // pred_region
      _
    $region37: #{tpu_custom_call.1} parent=1 // pred_fallthru
      _
    // Predicated region
    $region38: #{tpu_custom_call.1} parent=1 // pred_check
      _
    $region39: #{tpu_custom_call.1} parent=1 // pred_check_branch
      %77 = sbr.rel (0) target = $region41
    $region40: #{tpu_custom_call.1} parent=1 // pred_region
      %79 = dma.done [#allocation4], 128
    $region41: #{tpu_custom_call.1} parent=1 // pred_fallthru
      _
    // Predicated region
    $region42: #{tpu_custom_call.1} parent=1 // pred_check
      _
    $region43: #{tpu_custom_call.1} parent=1 // pred_check_branch
      %81 = sbr.rel (0) target = $region45
    $region44: #{tpu_custom_call.1} parent=1 // pred_region
      %83 = dma.done [#allocation6], 128
    $region45: #{tpu_custom_call.1} parent=1 // pred_fallthru
      _
    // Predicated region
    $region46: #{tpu_custom_call.1} parent=1 // pred_check
      _
    $region47: #{tpu_custom_call.1} parent=1 // pred_check_branch
      %85 = sbr.rel (0) target = $region49
    $region48: #{tpu_custom_call.1} parent=1 // pred_region
      %87 = dma.done [#allocation6], 192
    $region49: #{tpu_custom_call.1} parent=1 // pred_fallthru
      _
    // Predicated region
    $region50: #{tpu_custom_call.1} parent=1 // pred_check
      _
    $region51: #{tpu_custom_call.1} parent=1 // pred_check_branch
      %89 = sbr.rel (0) target = $region53
    $region52: #{tpu_custom_call.1} parent=1 // pred_region
      %91 = dma.done [#allocation9], 1024
    $region53: #{tpu_custom_call.1} parent=1 // pred_fallthru
      _
    %v93 = vld [vmem:[#allocation3] sm:$0xff]
    %v94 = vpack.c.bf16 %v93, %v93
    %v95 = vld [vmem:[#allocation5] sm:$0xff]
    %v96 = vpack.c.bf16 %v95, %v95
    %v97 = vld [vmem:[#allocation7] sm:$0xf]
    %v98 = vld [vmem:[#allocation7 + $0x4] sm:$0xf]
    %v99 = vld [vmem:[#allocation7 + $0x8] sm:$0xf]
    %v100 = vld [vmem:[%s3] sm:$0xf]
    %vm101 = vcmask 64512
    %v103 = vsel %vm101, %v96, 0
    %vm105 = vcmask 1043456
    %v107 = vsel %vm105, %v100, 0
    %109 = vmatpush.bf16.msra.mxu0 0
    %110 = vmatpush.bf16.msra.mxu0 0
    %111 = vmatpush.bf16.msra.mxu0 0
    %112 = vmatpush.bf16.msra.mxu0 0
    %113 = vmatpush.bf16.msra.mxu0 0
    %114 = vmatpush.bf16.msra.mxu0 0
    %115 = vmatpush.bf16.msra.mxu0 0
    %116 = vmatpush.bf16.msra.mxu0 %v107
    %117 = vmatmul.bf16.gmra.mxu0 %v103
    %v118 = vpop.f32.mrf.mxu0
    %v119 = vadd.f32 0.0, %v118
    %v120 = vpop.f32.mrf.mxu0
    %121 = vdwg.mxu0
    %v125 = vunpack.c.l.b16 %v97
    %v126 = vunpack.c.l.b16 %v98
    %v127 = vunpack.c.l.b16 %v99
    %v128 = vpack.c.b16 %v126, %v125
    %v129 = vpack.c.b16 %v127, %v127
    %vm131 = vcmask 195584
    %v133 = vsel %vm131, %v94, 0
    %v136 = vsel %vm105, %v129, 0
    %138 = vmatpush.bf16.msra.mxu0 0
    %139 = vmatpush.bf16.msra.mxu0 0
    %140 = vmatpush.bf16.msra.mxu0 0
    %141 = vmatpush.bf16.msra.mxu0 0
    %142 = vmatpush.bf16.msra.mxu0 0
    %143 = vmatpush.bf16.msra.mxu0 0
    %144 = vmatpush.bf16.msra.mxu0 %v136
    %145 = vmatpush.bf16.msra.mxu0 %v128
    %146 = vmatmul.bf16.gmra.mxu0 %v133
    %v147 = vpop.f32.mrf.mxu0
    %v148 = vadd.f32 %v119, %v147
    %v149 = vpop.f32.mrf.mxu0
    %150 = vdwg.mxu0
    %v151 = vld [vmem:[%s4] sm:$0x1]
    %v153 = vperm.slane %v151, 0
    %v155 = vadd.f32 %v148, %v153
    %v156 = vmax.f32 %v155, 0.0
    %v157 = vpack.c.bf16 %v156, %v156
    %v158 = vld [vmem:[#allocation8] sm:$0xf]
    %v159 = vld [vmem:[#allocation8 + $0x4] sm:$0xf]
    %v160 = vld [vmem:[#allocation8 + $0x8] sm:$0xf]
    %v161 = vld [vmem:[#allocation8 + $0xc] sm:$0xf]
    %v162 = vld [vmem:[#allocation8 + $0x10] sm:$0xf]
    %v163 = vld [vmem:[#allocation8 + $0x14] sm:$0xf]
    %v164 = vld [vmem:[#allocation8 + $0x18] sm:$0xf]
    %v165 = vld [vmem:[#allocation8 + $0x1c] sm:$0xf]
    %v166 = vld [vmem:[#allocation8 + $0x20] sm:$0xf]
    %v167 = vld [vmem:[#allocation8 + $0x24] sm:$0xf]
    %v168 = vld [vmem:[#allocation8 + $0x28] sm:$0xf]
    %v169 = vld [vmem:[#allocation8 + $0x2c] sm:$0xf]
    %v170 = vld [vmem:[#allocation8 + $0x30] sm:$0xf]
    %v171 = vld [vmem:[#allocation8 + $0x34] sm:$0xf]
    %v172 = vld [vmem:[#allocation8 + $0x38] sm:$0xf]
    %v173 = vld [vmem:[#allocation8 + $0x3c] sm:$0xf]
    %v174 = vld [vmem:[%s6] sm:$0x1]
    %v176 = vperm.slane %v174, 0
    %v194 = vunpack.c.l.b16 %v158
    %v195 = vunpack.c.l.b16 %v159
    %v196 = vunpack.c.l.b16 %v160
    %v197 = vunpack.c.l.b16 %v161
    %v198 = vunpack.c.l.b16 %v162
    %v199 = vunpack.c.l.b16 %v163
    %v200 = vunpack.c.l.b16 %v164
    %v201 = vunpack.c.l.b16 %v165
    %v202 = vunpack.c.l.b16 %v166
    %v203 = vunpack.c.l.b16 %v167
    %v204 = vunpack.c.l.b16 %v168
    %v205 = vunpack.c.l.b16 %v169
    %v206 = vunpack.c.l.b16 %v170
    %v207 = vunpack.c.l.b16 %v171
    %v208 = vunpack.c.l.b16 %v172
    %v209 = vunpack.c.l.b16 %v173
    %v210 = vpack.c.b16 %v195, %v194
    %v211 = vpack.c.b16 %v197, %v196
    %v212 = vpack.c.b16 %v199, %v198
    %v213 = vpack.c.b16 %v201, %v200
    %v214 = vpack.c.b16 %v203, %v202
    %v215 = vpack.c.b16 %v205, %v204
    %v216 = vpack.c.b16 %v207, %v206
    %v217 = vpack.c.b16 %v209, %v208
    %226 = vmatpush.bf16.msra.mxu0 %v217
    %227 = vmatpush.bf16.msra.mxu0 %v216
    %228 = vmatpush.bf16.msra.mxu0 %v215
    %229 = vmatpush.bf16.msra.mxu0 %v214
    %230 = vmatpush.bf16.msra.mxu0 %v213
    %231 = vmatpush.bf16.msra.mxu0 %v212
    %232 = vmatpush.bf16.msra.mxu0 %v211
    %233 = vmatpush.bf16.msra.mxu0 %v210
    %234 = vmatmul.bf16.gmra.mxu0 %v157
    %v235 = vpop.f32.mrf.mxu0
    %v236 = vadd.f32 %v176, %v235
    %v237 = vpop.f32.mrf.mxu0
    %238 = vdwg.mxu0
    %v239 = vmax.f32 %v236, 0.0
    %v240 = vld [vmem:[%s7] sm:$0x1]
    %v242 = vperm.slane %v240, 0
    %v244 = vmul.f32 %v239, %v242
    %245 = vadd.xlane.f32.xlu0 %v244
    %v246 = vpop.xlane.xlu0 %245
    %s247 = sld [smem:[#allocation2]]
    %v248 = vstv %s247
    %v249 = vadd.f32 %v246, %v248
    %vm250 = vcmask 7168
    %251 = vst.msk [vmem:[%s9] sm:$0xff] %vm250, %v249
    // Predicated region
    $region54: #{tpu_custom_call.1} parent=1 // pred_check
      _
    $region55: #{tpu_custom_call.1} parent=1 // pred_check_branch
      %253 = sbr.rel (0) target = $region57
    $region56: #{tpu_custom_call.1} parent=1 // pred_region
      _
    $region57: #{tpu_custom_call.1} parent=1 // pred_fallthru
      _
    // Predicated region
    $region58: #{tpu_custom_call.1} parent=1 // pred_check
      _
    $region59: #{tpu_custom_call.1} parent=1 // pred_check_branch
      %255 = sbr.rel (0) target = $region61
    $region60: #{tpu_custom_call.1} parent=1 // pred_region
      _
    $region61: #{tpu_custom_call.1} parent=1 // pred_fallthru
      _
    %256 = vsyncpa [#allocation4], 1
    %257 = vsyncpa [#allocation6], 1
    %258 = vsyncpa [#allocation9], 1

</llo_original>
